<compile_context>
chip_gen: v7x
topology: tpu7x:2x2x1
jax: 0.10.0
libtpu: 0.0.40
codegen_flags: <defaults>
</compile_context>

<pallas_src>
import functools

import jax
import jax.numpy as jnp
from jax import lax
from jax.experimental import pallas as pl
from jax.experimental.pallas import tpu as pltpu


def _round_up(x, m):
    return (x + m - 1) // m * m


_VMEM_BUDGET = 12 << 20   # fits v5e's 16 MiB scoped default; v6e/v7x have 32 MiB


# ----------------------------- Pallas kernel --------------------------------

def _conv_mm_kernel(w_ref, col_ref, b_ref, o_ref, acc_ref, *, relu):
    """(TC, TK) @ (TK, TM) MXU matmul, f32 accumulation over the K grid axis,
    fused folded-BN bias add + optional ReLU on the last K step."""
    @pl.when(pl.program_id(2) == 0)
    def _():
        acc_ref[...] = jnp.zeros_like(acc_ref)

    acc_ref[...] += jnp.dot(w_ref[...], col_ref[...],
                            preferred_element_type=jnp.float32)

    @pl.when(pl.program_id(2) == pl.num_programs(2) - 1)
    def _():
        acc = acc_ref[...] + b_ref[...]          # (TC, 1) broadcast over lanes
        if relu:
            acc = jnp.maximum(acc, 0.0)
        o_ref[...] = acc.astype(o_ref.dtype)


def _pick_tiles(cout, k, m):
    """Choose (C_pad, TC, K_pad, TK, M_pad, TM) for the fused matmul."""
    # Cout: bf16 sublane packing wants multiples of 16; tile at 256 for big C.
    c_pad = _round_up(cout, 16)
    tc = c_pad if c_pad <= 256 else 256
    c_pad = _round_up(c_pad, tc)

    # K (reduction): keep the whole K when small, else 128-aligned tiles so the
    # weight block's last dim stays unmasked.
    k16 = _round_up(k, 16)
    tk = k16 if k16 <= 2048 else 2048

    # M (lanes): target 512-wide tiles, but keep >= 2 tiles when possible so
    # the "parallel" grid axes can shard across v7x's two TensorCores.
    m128 = _round_up(m, 128)
    tm = 512
    while tm > 128 and m128 < 2 * tm:
        tm //= 2

    def vmem_bytes(tk_, tm_):
        return (2 * tk_ * tm_ * 2          # col tile, bf16, double-buffered
                + 2 * tc * tk_ * 2         # weight tile, bf16, double-buffered
                + 2 * tc * tm_ * 4         # output tile, f32, double-buffered
                + tc * tm_ * 4)            # f32 accumulator scratch

    while tk > 256 and tk % 256 == 0 and vmem_bytes(tk, tm) > _VMEM_BUDGET:
        tk //= 2
    while tm > 128 and vmem_bytes(tk, tm) > _VMEM_BUDGET:
        tm //= 2

    k_pad = _round_up(k16, tk)
    m_pad = _round_up(m128, tm)
    n_m = m_pad // tm
    if n_m > 1 and n_m % 2:                # even M-tile count for v7x megacore
        m_pad += tm
    return c_pad, tc, k_pad, tk, m_pad, tm


def _fused_conv_matmul(w_t, col_t, bias, *, relu, tc, tm, tk, out_dtype):
    """out_T = [relu]((w_t @ col_t) + bias), tiled (Cout, M, K)."""
    C, K = w_t.shape
    _, M = col_t.shape
    grid = (C // tc, M // tm, K // tk)
    kernel = functools.partial(_conv_mm_kernel, relu=relu)
    return pl.pallas_call(
        kernel,
        out_shape=jax.ShapeDtypeStruct((C, M), out_dtype),
        grid=grid,
        in_specs=[
            pl.BlockSpec((tc, tk), lambda c, i, k: (c, k)),   # folded weights
            # candidate to sweep: pipeline_mode=pl.Buffered(3) on this spec once
            # per-tile compute is tiny and the grid is long (mem-bound steps).
            pl.BlockSpec((tk, tm), lambda c, i, k: (k, i)),   # im2col columns
            pl.BlockSpec((tc, 1), lambda c, i, k: (c, 0)),    # folded BN bias
        ],
        out_specs=pl.BlockSpec((tc, tm), lambda c, i, k: (c, i)),
        scratch_shapes=[pltpu.VMEM((tc, tm), jnp.float32)],
        compiler_params=pltpu.CompilerParams(
            dimension_semantics=("parallel", "parallel", "arbitrary")),
    )(w_t, col_t, bias)


# ------------------------------ JAX glue -------------------------------------

def _im2col_km(x_cm, kh, kw, stride, pad, dtype):
    """Channel-major input (Cin, N, H, W) -> patch matrix (KH*KW*Cin, N*OH*OW),
    built directly in (K, M) layout (tap-major, cin-minor), no big transposes."""
    cin, n, h, w = x_cm.shape
    xp = jnp.pad(x_cm.astype(dtype), ((0, 0), (0, 0), (pad, pad), (pad, pad)))
    oh = (h + 2 * pad - kh) // stride + 1
    ow = (w + 2 * pad - kw) // stride + 1
    m = n * oh * ow
    rows = []
    for i in range(kh):
        for j in range(kw):
            tap = xp[:, :, i:i + stride * oh:stride, j:j + stride * ow:stride]
            rows.append(tap.reshape(cin, m))          # (Cin, M), already (K,M) row block
    col = jnp.concatenate(rows, axis=0)               # (KH*KW*Cin, M)
    return col, (n, oh, ow)


def bn_conv2d_cm(x_cm, w, gamma, beta, mean, var, *, stride, padding,
                 eps=1e-5, activation=True, out_dtype=jnp.float32):
    """Channel-major BN_Conv2d: x_cm (Cin, N, H, W) -> (Cout, N, OH, OW).

    Conv2d(bias=False, dilation=1, groups=1) -> BatchNorm2d(eval) -> [ReLU].
    Chained layers should stay in this layout to avoid NCHW round-trips.
    """
    cout, cin, kh, kw = w.shape

    # --- fold eval-mode BN into the conv (exact) ------------------------------
    scale = gamma * lax.rsqrt(var + eps)                                 # (Cout,)
    bias = beta - mean * scale                                           # (Cout,)
    w_t = w.transpose(0, 2, 3, 1).reshape(cout, kh * kw * cin) * scale[:, None]

    # --- im2col in (K, M) order (layout glue left to XLA) ---------------------
    # TODO(synk): fully in-kernel im2col (pl.ANY input + per-tap strided DMA into
    # a double-buffered VMEM tile) would cut HBM reads by ~KH*KW, but the strided
    # per-tap windows for stride > 1 are not expressible with BlockSpec, so the
    # (K, M) patch matrix is still materialized once by XLA (now with no large
    # transposes and already in bf16).
    col_t, (n, oh, ow) = _im2col_km(x_cm, kh, kw, stride, padding, jnp.bfloat16)

    # --- pad to tile-friendly sizes -------------------------------------------
    K, M = col_t.shape
    c_pad, tc, k_pad, tk, m_pad, tm = _pick_tiles(cout, K, M)

    col_t = jnp.pad(col_t, ((0, k_pad - K), (0, m_pad - M)))
    w_t = jnp.pad(w_t.astype(jnp.bfloat16), ((0, c_pad - cout), (0, k_pad - K)))
    bias2 = jnp.pad(bias.astype(jnp.float32), (0, c_pad - cout)).reshape(c_pad, 1)

    out_t = _fused_conv_matmul(w_t, col_t, bias2, relu=activation,
                               tc=tc, tm=tm, tk=tk, out_dtype=out_dtype)

    out_t = out_t[:cout, :M]                       # (Cout, N*OH*OW)
    return out_t.reshape(cout, n, oh, ow)          # channel-major, no transpose


def bn_conv2d(x, w, gamma, beta, mean, var, *, stride, padding,
              eps=1e-5, activation=True, out_dtype=jnp.float32):
    """PyTorch-layout BN_Conv2d: x (N, Cin, H, W) -> (N, Cout, OH, OW)."""
    y_cm = bn_conv2d_cm(jnp.transpose(x, (1, 0, 2, 3)), w, gamma, beta, mean,
                        var, stride=stride, padding=padding, eps=eps,
                        activation=activation, out_dtype=out_dtype)
    return jnp.transpose(y_cm, (1, 0, 2, 3))


# -------------------------- plain-JAX reference ------------------------------

def bn_conv2d_ref(x, w, gamma, beta, mean, var, *, stride, padding,
                  eps=1e-5, activation=True):
    y = lax.conv_general_dilated(
        x, w, window_strides=(stride, stride),
        padding=[(padding, padding), (padding, padding)],
        dimension_numbers=("NCHW", "OIHW", "NCHW"),
        precision=lax.Precision.HIGHEST)
    s = (gamma * lax.rsqrt(var + eps)).reshape(1, -1, 1, 1)
    b = (beta - mean * gamma * lax.rsqrt(var + eps)).reshape(1, -1, 1, 1)
    y = y * s + b
    return jnp.maximum(y, 0.0) if activation else y


# --------------------------------- main --------------------------------------

if __name__ == "__main__":
    key = jax.random.PRNGKey(0)
    (kx, kw1, kg1, kb1, km1, kv1,
     kw2, kg2, kb2, km2, kv2) = jax.random.split(key, 11)

    def make_layer(kw_, kg_, kb_, km_, kv_, cin, cout, k):
        std = (2.0 / (k * k * cin)) ** 0.5
        return dict(
            w=std * jax.random.normal(kw_, (cout, cin, k, k), jnp.float32),
            gamma=jax.random.uniform(kg_, (cout,), jnp.float32, 0.5, 1.5),
            beta=0.1 * jax.random.normal(kb_, (cout,), jnp.float32),
            mean=0.1 * jax.random.normal(km_, (cout,), jnp.float32),
            var=jax.random.uniform(kv_, (cout,), jnp.float32, 0.5, 1.5),
        )

    # BN_Conv2d(4, 32, kernel_size=3, stride=1, padding=1) on a (2,4,16,16) input
    x = jax.random.normal(kx, (2, 4, 16, 16), jnp.float32)
    l1 = make_layer(kw1, kg1, kb1, km1, kv1, 4, 32, 3)
    # BN_Conv2d(32, 64, kernel_size=3, stride=2, padding=1, activation=False)
    l2 = make_layer(kw2, kg2, kb2, km2, kv2, 32, 64, 3)

    # chained layers stay channel-major; NCHW only at the network boundary
    f1 = jax.jit(functools.partial(bn_conv2d_cm, stride=1, padding=1,
                                   activation=True))
    f2 = jax.jit(functools.partial(bn_conv2d_cm, stride=2, padding=1,
                                   activation=False))

    x_cm = jnp.transpose(x, (1, 0, 2, 3))
    y1_cm = f1(x_cm, l1["w"], l1["gamma"], l1["beta"], l1["mean"], l1["var"])
    y2_cm = f2(y1_cm, l2["w"], l2["gamma"], l2["beta"], l2["mean"], l2["var"])
    jax.block_until_ready((y1_cm, y2_cm))

    y1 = jnp.transpose(y1_cm, (1, 0, 2, 3))
    y2 = jnp.transpose(y2_cm, (1, 0, 2, 3))

    # NCHW wrapper matches the channel-major path bit-for-bit (same ops)
    y1_api = jax.jit(functools.partial(bn_conv2d, stride=1, padding=1,
                                       activation=True))(
        x, l1["w"], l1["gamma"], l1["beta"], l1["mean"], l1["var"])
    assert bool(jnp.allclose(y1_api, y1, atol=1e-6, rtol=1e-6))

    # per-layer correctness check against an f32 XLA reference
    r1 = bn_conv2d_ref(x, l1["w"], l1["gamma"], l1["beta"], l1["mean"], l1["var"],
                       stride=1, padding=1, activation=True)
    r2 = bn_conv2d_ref(y1, l2["w"], l2["gamma"], l2["beta"], l2["mean"], l2["var"],
                       stride=2, padding=1, activation=False)

    assert y1.shape == (2, 32, 16, 16) and y2.shape == (2, 64, 8, 8)
    assert bool(jnp.allclose(y1, r1, atol=1e-1, rtol=5e-2))   # bf16 matmul tol
    assert bool(jnp.allclose(y2, r2, atol=2e-1, rtol=5e-2))
    print("KERNEL_OK")
</pallas_src>

<mosaic_0001>
module attributes {stable_mosaic.version = 11 : i64} {
  func.func @_conv_mm_kernel(%arg0: i32, %arg1: i32, %arg2: i32, %arg3: memref<32x48xbf16, #tpu.memory_space<vmem>>, %arg4: memref<48x256xbf16, #tpu.memory_space<vmem>>, %arg5: memref<32x1xf32, #tpu.memory_space<vmem>>, %arg6: memref<32x256xf32, #tpu.memory_space<vmem>>, %arg7: memref<32x256xf32, #tpu.memory_space<vmem>>) attributes {dimension_semantics = [#tpu.dimension_semantics<parallel>, #tpu.dimension_semantics<parallel>, #tpu.dimension_semantics<arbitrary>], iteration_bounds = array<i64: 1, 2, 1>, scalar_prefetch = 0 : i64, scratch_operands = 1 : i64, tpu.core_type = #tpu.core_type<tc>, window_params = [{transform_indices = @transform_0, window_bounds = array<i64: 32, 48>}, {transform_indices = @transform_1, window_bounds = array<i64: 48, 256>}, {transform_indices = @transform_2, window_bounds = array<i64: 32, 1>}, {transform_indices = @transform_3, window_bounds = array<i64: 32, 256>}]} {
    %c0_i32 = arith.constant 0 : i32
    %0 = arith.cmpi eq, %arg2, %c0_i32 : i32
    %1 = arith.extui %0 : i1 to i32
    %c0_i32_0 = arith.constant 0 : i32
    %2 = arith.cmpi ne, %1, %c0_i32_0 : i32
    scf.if %2 {
      %cst_10 = arith.constant 0.000000e+00 : f32
      %12 = vector.broadcast %cst_10 : f32 to vector<32x256xf32>
      %c0_11 = arith.constant 0 : index
      %c0_12 = arith.constant 0 : index
      %13 = vector.load %arg7[%c0_11, %c0_12] : memref<32x256xf32, #tpu.memory_space<vmem>>, vector<32x256xf32>
      tpu.vector_store %arg7[%c0_11, %c0_12], %12 {strides = array<i32>} : memref<32x256xf32, #tpu.memory_space<vmem>>, vector<32x256xf32>,
    } else {
    }
    %c0 = arith.constant 0 : index
    %c0_1 = arith.constant 0 : index
    %3 = vector.load %arg7[%c0, %c0_1] : memref<32x256xf32, #tpu.memory_space<vmem>>, vector<32x256xf32>
    %c0_2 = arith.constant 0 : index
    %c0_3 = arith.constant 0 : index
    %4 = vector.load %arg3[%c0_2, %c0_3] : memref<32x48xbf16, #tpu.memory_space<vmem>>, vector<32x48xbf16>
    %c0_4 = arith.constant 0 : index
    %c0_5 = arith.constant 0 : index
    %5 = vector.load %arg4[%c0_4, %c0_5] : memref<48x256xbf16, #tpu.memory_space<vmem>>, vector<48x256xbf16>
    %cst = arith.constant dense<0.000000e+00> : vector<32x256xf32>
    %6 = tpu.matmul %4, %5, %cst {dimension_numbers = #tpu.dot_dimension_numbers<[1], [0], [0], [1], [0, 0, 1, 1], [], []>} : vector<32x48xbf16>, vector<48x256xbf16>, vector<32x256xf32> -> vector<32x256xf32>
    %7 = arith.addf %3, %6 : vector<32x256xf32>
    %c0_6 = arith.constant 0 : index
    %c0_7 = arith.constant 0 : index
    %8 = vector.load %arg7[%c0_6, %c0_7] : memref<32x256xf32, #tpu.memory_space<vmem>>, vector<32x256xf32>
    tpu.vector_store %arg7[%c0_6, %c0_7], %7 {strides = array<i32>} : memref<32x256xf32, #tpu.memory_space<vmem>>, vector<32x256xf32>,
    %c0_i32_8 = arith.constant 0 : i32
    %9 = arith.cmpi eq, %arg2, %c0_i32_8 : i32
    %10 = arith.extui %9 : i1 to i32
    %c0_i32_9 = arith.constant 0 : i32
    %11 = arith.cmpi ne, %10, %c0_i32_9 : i32
    scf.if %11 {
      %c0_10 = arith.constant 0 : index
      %c0_11 = arith.constant 0 : index
      %12 = vector.load %arg7[%c0_10, %c0_11] : memref<32x256xf32, #tpu.memory_space<vmem>>, vector<32x256xf32>
      %c0_12 = arith.constant 0 : index
      %c0_13 = arith.constant 0 : index
      %13 = vector.load %arg5[%c0_12, %c0_13] : memref<32x1xf32, #tpu.memory_space<vmem>>, vector<32x1xf32>
      %14 = vector.broadcast %13 : vector<32x1xf32> to vector<32x256xf32>
      %15 = arith.addf %12, %14 : vector<32x256xf32>
      %cst_14 = arith.constant 0.000000e+00 : f32
      %16 = vector.broadcast %cst_14 : f32 to vector<32x256xf32>
      %17 = arith.maximumf %15, %16 : vector<32x256xf32>
      %c0_15 = arith.constant 0 : index
      %c0_16 = arith.constant 0 : index
      %18 = vector.load %arg6[%c0_15, %c0_16] : memref<32x256xf32, #tpu.memory_space<vmem>>, vector<32x256xf32>
      tpu.vector_store %arg6[%c0_15, %c0_16], %17 {strides = array<i32>} : memref<32x256xf32, #tpu.memory_space<vmem>>, vector<32x256xf32>,
    } else {
    }
    return
  }
  func.func @transform_0(%arg0: i32, %arg1: i32, %arg2: i32) -> (i32, i32) {
    %c0_i32 = arith.constant 0 : i32
    return %arg0, %arg2 : i32, i32
  }
  func.func @transform_1(%arg0: i32, %arg1: i32, %arg2: i32) -> (i32, i32) {
    %c0_i32 = arith.constant 0 : i32
    return %arg2, %arg1 : i32, i32
  }
  func.func @transform_2(%arg0: i32, %arg1: i32, %arg2: i32) -> (i32, i32) {
    %c0_i32 = arith.constant 0 : i32
    %c0_i32_0 = arith.constant 0 : i32
    return %arg0, %c0_i32 : i32, i32
  }
  func.func @transform_3(%arg0: i32, %arg1: i32, %arg2: i32) -> (i32, i32) {
    %c0_i32 = arith.constant 0 : i32
    return %arg0, %arg1 : i32, i32
  }
}

</mosaic_0001>

<llo_original>
// kernel: bn_conv2d_cm.1
$region0: #{bn_conv2d_cm.1}
  #allocation0 [shape = 'u32[]', space=smem, size = 0x4, offset = 0x4, fixed_abs, tag = 'smem constant byte address 0x4 - core index']
  #allocation1 [shape = 'u32[144,128]{1,0:T(1,128)}', space=vmem, size = 0x12000, scoped, tag = 'internal scratch']
  #allocation2 [shape = 'f32[32,256]{1,0:T(8,128)}', space=vmem, size = 0x8000, scoped, tag = 'scratch operand']
  %s0 = inlined_call_operand.vmem [shape: bf16[32,48], index: 0, kind: input, shape index: {}]
  %s1 = inlined_call_operand.vmem [shape: bf16[48,512], index: 1, kind: input, shape index: {}]
  %s2 = inlined_call_operand.vmem [shape: f32[32,1], index: 2, kind: input, shape index: {}]
  %s3 = inlined_call_operand.vmem [shape: f32[32,512], index: 3, kind: output, shape index: {}]
  %s4 = sld [smem:[#allocation0]]
  $region110: #{bn_conv2d_cm.1} parent=0
    _
  %s6 = ssub.s32 1, %s4
  %s7 = scalar_select 0, %s6, %s4
  $region1: #{bn_conv2d_cm.1} parent=0
    #allocation3 [shape = 'u8[49152]{0}', space=vmem, size = 0xc000, scoped, tag = 'input window, operand 1']
    #allocation4 [shape = 'u8[65536]{0}', space=vmem, size = 0x10000, scoped, tag = 'output window, operand 0']
    loop: start=0, step=1, limit=4
    $region2: #{bn_conv2d_cm.1} parent=1 // loop_pre_header
      _
    $region3: #{bn_conv2d_cm.1} parent=1 // loop_header
      %s9 = sphi 0, %s13
      %p10 = scmp.ge.s32.totalorder %s9, 4
      %s16 = sphi 0, %s35
      %s17 = sphi 0, %s31
      %s18 = sphi 0, %s27
      %s19 = sphi 0, %s16
      %s20 = sphi 0, %s17
      %s21 = sphi 0, %s18
      %s22 = sphi 0, %s19
      %s23 = sphi 0, %s20
      %s24 = sphi 0, %s21
      %s40 = sphi 0, %s42
      %s43 = sphi 0, %s40
      %s44 = sphi 0, %s43
      %s60 = sphi 0, %s44
      %s68 = sphi 0, %s70
      %s71 = sphi 0, %s68
      %s72 = sphi 0, %s71
      %s88 = sphi 0, %s72
      %s94 = sphi 0, %s96
      %s97 = sphi 0, %s94
      %s98 = sphi 0, %s97
      %s114 = sphi 0, %s98
      %s122 = sphi 0, %s124
      %s125 = sphi 0, %s122
      %s126 = sphi 0, %s125
      %s142 = sphi 0, %s126
    $region4: #{bn_conv2d_cm.1} parent=1 // loop_header_branch
      %12 = sbr.rel (%p10) target = $region8
    $region5: #{bn_conv2d_cm.1} parent=1 // loop_body
      %s14 = ssub.s32 %s9, 1
      %s15 = ssub.s32 %s9, 2
      %s25 = sadd.s32 1, %s18
      %p26 = scmp.ge.s32.totalorder %s25, 1
      %s27 = scalar_select %p26, 0, %s25
      %s28 = sadd.s32 1, %s17
      %s29 = scalar_select %p26, %s28, %s17
      %p30 = scmp.ge.s32.totalorder %s29, 2
      %s31 = scalar_select %p30, 0, %s29
      %s32 = sadd.s32 1, %s16
      %s33 = scalar_select %p30, %s32, %s16
      %p34 = scmp.ge.s32.totalorder %s33, 1
      %s35 = scalar_select %p34, 0, %s33
      %s36 = ssub.s32 %s16, %s35
      %s37 = ssub.s32 %s18, %s27
      %s38 = sor.u32 %s36, %s37
      %p39 = scmp.eq.s32.totalorder %s38, 0
      %s41 = sadd.s32 %s40, 1
      %s42 = scalar_select %p39, %s40, %s41
      %p45 = pneg %p39
      %p46 = scmp.eq.s32.totalorder %s9, 1
      %p47 = por %p45, %p46
      %p48 = scmp.ne.s32.totalorder %s40, %s43
      %p49 = scmp.eq.s32.totalorder %s9, 0
      %p50 = por %p48, %p49
      %p51 = scmp.ne.s32.totalorder %s40, %s43
      %p52 = scmp.eq.s32.totalorder %s14, 1
      %p53 = por %p51, %p52
      %p54 = scmp.ne.s32.totalorder %s43, %s44
      %p55 = scmp.eq.s32.totalorder %s14, 0
      %p56 = por %p54, %p55
      %p57 = scmp.ne.s32.totalorder %s43, %s44
      %p58 = scmp.eq.s32.totalorder %s15, 1
      %p59 = por %p57, %p58
      %p61 = scmp.ne.s32.totalorder %s44, %s60
      %p62 = scmp.eq.s32.totalorder %s15, 0
      %p63 = por %p61, %p62
      %s64 = ssub.s32 %s18, %s27
      %s65 = ssub.s32 %s17, %s31
      %s66 = sor.u32 %s64, %s65
      %p67 = scmp.eq.s32.totalorder %s66, 0
      %s69 = sadd.s32 %s68, 1
      %s70 = scalar_select %p67, %s68, %s69
      %p73 = pneg %p67
      %p74 = scmp.eq.s32.totalorder %s9, 1
      %p75 = por %p73, %p74
      %p76 = scmp.ne.s32.totalorder %s68, %s71
      %p77 = scmp.eq.s32.totalorder %s9, 0
      %p78 = por %p76, %p77
      %p79 = scmp.ne.s32.totalorder %s68, %s71
      %p80 = scmp.eq.s32.totalorder %s14, 1
      %p81 = por %p79, %p80
      %p82 = scmp.ne.s32.totalorder %s71, %s72
      %p83 = scmp.eq.s32.totalorder %s14, 0
      %p84 = por %p82, %p83
      %p85 = scmp.ne.s32.totalorder %s71, %s72
      %p86 = scmp.eq.s32.totalorder %s15, 1
      %p87 = por %p85, %p86
      %p89 = scmp.ne.s32.totalorder %s72, %s88
      %p90 = scmp.eq.s32.totalorder %s15, 0
      %p91 = por %p89, %p90
      %s92 = ssub.s32 %s16, %s35
      %p93 = scmp.eq.s32.totalorder %s92, 0
      %s95 = sadd.s32 %s94, 1
      %s96 = scalar_select %p93, %s94, %s95
      %p99 = pneg %p93
      %p100 = scmp.eq.s32.totalorder %s9, 1
      %p101 = por %p99, %p100
      %p102 = scmp.ne.s32.totalorder %s94, %s97
      %p103 = scmp.eq.s32.totalorder %s9, 0
      %p104 = por %p102, %p103
      %p105 = scmp.ne.s32.totalorder %s94, %s97
      %p106 = scmp.eq.s32.totalorder %s14, 1
      %p107 = por %p105, %p106
      %p108 = scmp.ne.s32.totalorder %s97, %s98
      %p109 = scmp.eq.s32.totalorder %s14, 0
      %p110 = por %p108, %p109
      %p111 = scmp.ne.s32.totalorder %s97, %s98
      %p112 = scmp.eq.s32.totalorder %s15, 1
      %p113 = por %p111, %p112
      %p115 = scmp.ne.s32.totalorder %s98, %s114
      %p116 = scmp.eq.s32.totalorder %s15, 0
      %p117 = por %p115, %p116
      %s118 = ssub.s32 %s16, %s35
      %s119 = ssub.s32 %s17, %s31
      %s120 = sor.u32 %s118, %s119
      %p121 = scmp.eq.s32.totalorder %s120, 0
      %s123 = sadd.s32 %s122, 1
      %s124 = scalar_select %p121, %s122, %s123
      %p127 = pneg %p121
      %p128 = scmp.eq.s32.totalorder %s9, 1
      %p129 = por %p127, %p128
      %p130 = scmp.ne.s32.totalorder %s122, %s125
      %p131 = scmp.eq.s32.totalorder %s9, 0
      %p132 = por %p130, %p131
      %p133 = scmp.ne.s32.totalorder %s122, %s125
      %p134 = scmp.eq.s32.totalorder %s14, 1
      %p135 = por %p133, %p134
      %p136 = scmp.ne.s32.totalorder %s125, %s126
      %p137 = scmp.eq.s32.totalorder %s14, 0
      %p138 = por %p136, %p137
      %p139 = scmp.ne.s32.totalorder %s125, %s126
      %p140 = scmp.eq.s32.totalorder %s15, 1
      %p141 = por %p139, %p140
      %p143 = scmp.ne.s32.totalorder %s126, %s142
      %p144 = scmp.eq.s32.totalorder %s15, 0
      %p145 = por %p143, %p144
      %p146 = scmp.le.s32.totalorder 1, %s9
      %p147 = scmp.lt.s32.totalorder %s9, 3
      %p148 = pnand %p146, %p147
      %p149 = pneg %p148
      // Predicated region
      $region9: #{bn_conv2d_cm.1} parent=5 // pred_check
        _
      $region10: #{bn_conv2d_cm.1} parent=5 // pred_check_branch
        %151 = sbr.rel (%p148) target = $region12
      $region11: #{bn_conv2d_cm.1} parent=5 // pred_region
        %s152 = ssub.s32 %s9, 1
        // Predicated region
        $region13: #{bn_conv2d_cm.1} parent=11 // pred_check
          %p153 = pneg %p56
        $region14: #{bn_conv2d_cm.1} parent=11 // pred_check_branch
          %155 = sbr.rel (%p153) target = $region16
        $region15: #{bn_conv2d_cm.1} parent=11 // pred_region
          %s156 = smul.u32 4, %s19
          %p157 = scmp.lt.s32.totalorder %s156, 3
          %s158 = scalar_select %p157, %s156, 3
          %p159 = scmp.lt.s32.totalorder %s21, 0
          %s160 = scalar_select %p159, %s21, 0
          %s161 = sadd.s32 %s160, %s158
          %s162 = smul.addr %s161, 4
          %s163 = scalar_lea.vmem %s0, %s162
          %s164 = smul.u32 4, %s19
        $region16: #{bn_conv2d_cm.1} parent=11 // pred_fallthru
          _
        // Predicated region
        $region17: #{bn_conv2d_cm.1} parent=11 // pred_check
          %p165 = pneg %p110
        $region18: #{bn_conv2d_cm.1} parent=11 // pred_check_branch
          %167 = sbr.rel (%p165) target = $region20
        $region19: #{bn_conv2d_cm.1} parent=11 // pred_region
          %s168 = smul.u32 4, %s19
          %p169 = scmp.lt.s32.totalorder %s168, 3
          %s170 = scalar_select %p169, %s168, 3
          %s171 = smul.addr %s170, 8
          %s172 = scalar_lea.vmem %s2, %s171
          %s173 = smul.u32 4, %s19
        $region20: #{bn_conv2d_cm.1} parent=11 // pred_fallthru
          _
      $region12: #{bn_conv2d_cm.1} parent=5 // pred_fallthru
        _
      %p174 = scmp.lt.s32.totalorder %s9, 2
      // Predicated region
      $region21: #{bn_conv2d_cm.1} parent=5 // pred_check
        %p175 = pneg %p174
      $region22: #{bn_conv2d_cm.1} parent=5 // pred_check_branch
        %177 = sbr.rel (%p175) target = $region24
      $region23: #{bn_conv2d_cm.1} parent=5 // pred_region
        // Predicated region
        $region25: #{bn_conv2d_cm.1} parent=23 // pred_check
          %p178 = pneg %p78
        $region26: #{bn_conv2d_cm.1} parent=23 // pred_check_branch
          %180 = sbr.rel (%p178) target = $region28
        $region27: #{bn_conv2d_cm.1} parent=23 // pred_region
          %s181 = sand.u32 %s68, 1
          %s182 = sand.u32 %s68, 1
          %s183 = smul.addr %s182, 48
          %s184 = scalar_lea.vmem [#allocation3], %s183
          %s185 = smul.u32 6, %s18
          %s186 = smul.u32 2, %s17
          %s187 = smul.addr %s185, 4
          %s188 = sadd.s32 %s186, %s187
          %s189 = smul.addr %s188, 4
          %s190 = scalar_lea.vmem %s1, %s189
          // Predicated region
          $region29: #{bn_conv2d_cm.1} parent=27 // pred_check
            _
          $region30: #{bn_conv2d_cm.1} parent=27 // pred_check_branch
            %192 = sbr.rel (0) target = $region32
          $region31: #{bn_conv2d_cm.1} parent=27 // pred_region
            // Predicated region
            $region33: #{bn_conv2d_cm.1} parent=31 // pred_check
              _
            $region34: #{bn_conv2d_cm.1} parent=31 // pred_check_branch
              %194 = sbr.rel (0) target = $region36
            $region35: #{bn_conv2d_cm.1} parent=31 // pred_region
              // Predicated region
              $region48: #{bn_conv2d_cm.1} parent=35 // pred_check
                _
              $region49: #{bn_conv2d_cm.1} parent=35 // pred_check_branch
                %219 = sbr.rel (0) target = $region51
              $region50: #{bn_conv2d_cm.1} parent=35 // pred_region
                loop: start=0, step=1, limit=1
                $region52: #{bn_conv2d_cm.1} parent=50 // loop_pre_header
                  _
                $region53: #{bn_conv2d_cm.1} parent=50 // loop_header
                  %s221 = sphi 0, %s225
                  %p222 = scmp.ge.s32.totalorder %s221, 1
                  %s226 = sphi %s190, %s190
                  %s227 = sphi %s184, %s184
                $region54: #{bn_conv2d_cm.1} parent=50 // loop_header_branch
                  %224 = sbr.rel (%p222) target = $region58
                $region55: #{bn_conv2d_cm.1} parent=50 // loop_body
                  %v228 = vld [vmem:[%s226] sm:$0xff]
                  %229 = vst [vmem:[%s227] sm:$0xff] %v228
                  %v230 = vld [vmem:[%s226 + $0x10] sm:$0xff]
                  %231 = vst [vmem:[%s227 + $0x8] sm:$0xff] %v230
                  %v232 = vld [vmem:[%s226 + $0x20] sm:$0xff]
                  %233 = vst [vmem:[%s227 + $0x10] sm:$0xff] %v232
                  %v234 = vld [vmem:[%s226 + $0x30] sm:$0xff]
                  %235 = vst [vmem:[%s227 + $0x18] sm:$0xff] %v234
                  %v236 = vld [vmem:[%s226 + $0x40] sm:$0xff]
                  %237 = vst [vmem:[%s227 + $0x20] sm:$0xff] %v236
                  %v238 = vld [vmem:[%s226 + $0x50] sm:$0xff]
                  %239 = vst [vmem:[%s227 + $0x28] sm:$0xff] %v238
                $region56: #{bn_conv2d_cm.1} parent=50 // loop_footer
                  %s225 = sadd.s32 1, %s221
                $region57: #{bn_conv2d_cm.1} parent=50 // loop_footer_branch
                  %220 = sbr.rel target = $region53
                $region58: #{bn_conv2d_cm.1} parent=50 // loop_exit
                  _
              $region51: #{bn_conv2d_cm.1} parent=35 // pred_fallthru
                _
              // Predicated region
              $region59: #{bn_conv2d_cm.1} parent=35 // pred_check
                _
              $region60: #{bn_conv2d_cm.1} parent=35 // pred_check_branch
                %241 = sbr.rel target = $region62
              $region61: #{bn_conv2d_cm.1} parent=35 // pred_region
                _
              $region62: #{bn_conv2d_cm.1} parent=35 // pred_fallthru
                _
            $region36: #{bn_conv2d_cm.1} parent=31 // pred_fallthru
              _
            // Predicated region
            $region37: #{bn_conv2d_cm.1} parent=31 // pred_check
              _
            $region38: #{bn_conv2d_cm.1} parent=31 // pred_check_branch
              %196 = sbr.rel target = $region40
            $region39: #{bn_conv2d_cm.1} parent=31 // pred_region
              loop: start=0, step=1, limit=1
              $region41: #{bn_conv2d_cm.1} parent=39 // loop_pre_header
                _
              $region42: #{bn_conv2d_cm.1} parent=39 // loop_header
                %s199 = sphi 0, %s203
                %p200 = scmp.ge.s32.totalorder %s199, 1
                %s204 = sphi %s190, %s190
                %s205 = sphi %s184, %s184
              $region43: #{bn_conv2d_cm.1} parent=39 // loop_header_branch
                %202 = sbr.rel (%p200) target = $region47
              $region44: #{bn_conv2d_cm.1} parent=39 // loop_body
                %v206 = vld [vmem:[%s204] sm:$0xff]
                %207 = vst [vmem:[%s205] sm:$0xff] %v206
                %v208 = vld [vmem:[%s204 + $0x10] sm:$0xff]
                %209 = vst [vmem:[%s205 + $0x8] sm:$0xff] %v208
                %v210 = vld [vmem:[%s204 + $0x20] sm:$0xff]
                %211 = vst [vmem:[%s205 + $0x10] sm:$0xff] %v210
                %v212 = vld [vmem:[%s204 + $0x30] sm:$0xff]
                %213 = vst [vmem:[%s205 + $0x18] sm:$0xff] %v212
                %v214 = vld [vmem:[%s204 + $0x40] sm:$0xff]
                %215 = vst [vmem:[%s205 + $0x20] sm:$0xff] %v214
                %v216 = vld [vmem:[%s204 + $0x50] sm:$0xff]
                %217 = vst [vmem:[%s205 + $0x28] sm:$0xff] %v216
              $region45: #{bn_conv2d_cm.1} parent=39 // loop_footer
                %s203 = sadd.s32 1, %s199
              $region46: #{bn_conv2d_cm.1} parent=39 // loop_footer_branch
                %198 = sbr.rel target = $region42
              $region47: #{bn_conv2d_cm.1} parent=39 // loop_exit
                _
            $region40: #{bn_conv2d_cm.1} parent=31 // pred_fallthru
              _
          $region32: #{bn_conv2d_cm.1} parent=27 // pred_fallthru
            _
          %242 = vnop
        $region28: #{bn_conv2d_cm.1} parent=23 // pred_fallthru
          _
      $region24: #{bn_conv2d_cm.1} parent=5 // pred_fallthru
        _
      %p243 = scmp.le.s32.totalorder 1, %s9
      %p244 = scmp.lt.s32.totalorder %s9, 3
      %p245 = pnand %p243, %p244
      %p246 = pneg %p245
      // Predicated region
      $region63: #{bn_conv2d_cm.1} parent=5 // pred_check
        _
      $region64: #{bn_conv2d_cm.1} parent=5 // pred_check_branch
        %248 = sbr.rel (%p245) target = $region66
      $region65: #{bn_conv2d_cm.1} parent=5 // pred_region
        %s249 = ssub.s32 %s9, 1
        %s250 = sand.u32 %s71, 1
        %s251 = sand.u32 %s71, 1
        %s252 = smul.addr %s251, 48
        %s253 = scalar_lea.vmem [#allocation3], %s252
        // Predicated region
        $region67: #{bn_conv2d_cm.1} parent=65 // pred_check
          %p254 = pneg %p84
        $region68: #{bn_conv2d_cm.1} parent=65 // pred_check_branch
          %256 = sbr.rel (%p254) target = $region70
        $region69: #{bn_conv2d_cm.1} parent=65 // pred_region
          _
        $region70: #{bn_conv2d_cm.1} parent=65 // pred_fallthru
          _
        %s257 = smul.u32 4, %s19
        %p258 = scmp.lt.s32.totalorder %s257, 3
        %s259 = scalar_select %p258, %s257, 3
        %p260 = scmp.lt.s32.totalorder %s21, 0
        %s261 = scalar_select %p260, %s21, 0
        %s262 = sadd.s32 %s261, %s259
        %s263 = smul.addr %s262, 4
        %s264 = scalar_lea.vmem %s0, %s263
        %p265 = pneg %p56
        %p266 = pneg %p53
        %s267 = sand.u32 %s71, 1
        %s268 = sand.u32 %s71, 1
        %s269 = smul.addr %s268, 48
        %s270 = scalar_lea.vmem [#allocation3], %s269
        %p271 = pneg %p84
        %p272 = pneg %p81
        %s273 = smul.u32 4, %s19
        %p274 = scmp.lt.s32.totalorder %s273, 3
        %s275 = scalar_select %p274, %s273, 3
        %s276 = smul.addr %s275, 8
        %s277 = scalar_lea.vmem %s2, %s276
        %p278 = pneg %p110
        %p279 = pneg %p107
        %p280 = pneg %p138
        %p281 = pneg %p135
        %s282 = sand.u32 %s125, 1
        %s283 = sand.u32 %s125, 1
        %s284 = smul.addr %s283, 64
        %s285 = scalar_lea.vmem [#allocation4], %s284
        %s286 = smul.u32 4, %s19
        %p287 = scmp.lt.s32.totalorder %s286, 3
        %s288 = scalar_select %p287, %s286, 3
        %p289 = scmp.lt.s32.totalorder %s21, 0
        %s290 = scalar_select %p289, %s21, 0
        %s291 = sadd.s32 %s290, %s288
        %s292 = smul.addr %s291, 4
        %s293 = scalar_lea.vmem %s0, %s292
        %s294 = smul.u32 4, %s19
        %s295 = smul.u32 6, %s21
        %s296 = smul.u32 2, %s20
        %s297 = smul.u32 4, %s19
        %p298 = scmp.lt.s32.totalorder %s297, 3
        %s299 = scalar_select %p298, %s297, 3
        %s300 = smul.addr %s299, 8
        %s301 = scalar_lea.vmem %s2, %s300
        %s302 = smul.u32 4, %s19
        %s303 = smul.u32 4, %s19
        %s304 = smul.u32 2, %s20
        %p306 = scmp.eq.s32.totalorder %s21, 0
        // Predicated region
        $region71: #{bn_conv2d_cm.1} parent=65 // pred_check
          %p307 = pneg %p306
        $region72: #{bn_conv2d_cm.1} parent=65 // pred_check_branch
          %309 = sbr.rel (%p307) target = $region74
        $region73: #{bn_conv2d_cm.1} parent=65 // pred_region
          %310 = vst [vmem:[#allocation2] sm:$0xff] 0.0
          %311 = vst [vmem:[#allocation2 + $0x8] sm:$0xff] 0.0
          %312 = vst [vmem:[#allocation2 + $0x10] sm:$0xff] 0.0
          %313 = vst [vmem:[#allocation2 + $0x18] sm:$0xff] 0.0
          %314 = vst [vmem:[#allocation2 + $0x20] sm:$0xff] 0.0
          %315 = vst [vmem:[#allocation2 + $0x28] sm:$0xff] 0.0
          %316 = vst [vmem:[#allocation2 + $0x30] sm:$0xff] 0.0
          %317 = vst [vmem:[#allocation2 + $0x38] sm:$0xff] 0.0
        $region74: #{bn_conv2d_cm.1} parent=65 // pred_fallthru
          _
        %v318 = vld [vmem:[#allocation2] sm:$0xff]
        %v319 = vld [vmem:[#allocation2 + $0x8] sm:$0xff]
        %v320 = vld [vmem:[#allocation2 + $0x10] sm:$0xff]
        %v321 = vld [vmem:[#allocation2 + $0x18] sm:$0xff]
        %v322 = vld [vmem:[#allocation2 + $0x20] sm:$0xff]
        %v323 = vld [vmem:[#allocation2 + $0x28] sm:$0xff]
        %v324 = vld [vmem:[#allocation2 + $0x30] sm:$0xff]
        %v325 = vld [vmem:[#allocation2 + $0x38] sm:$0xff]
        %v326 = vld [vmem:[%s293] sm:$0xf]
        %v327 = vld [vmem:[%s293 + $0x4] sm:$0xf]
        %v328 = vld [vmem:[%s293 + $0x8] sm:$0xf]
        %v329 = vld [vmem:[%s293 + $0xc] sm:$0xf]
        %v330 = vld [vmem:[%s253] sm:$0xff]
        %v331 = vld [vmem:[%s253 + $0x8] sm:$0xff]
        %v332 = vld [vmem:[%s253 + $0x10] sm:$0xff]
        %v333 = vld [vmem:[%s253 + $0x18] sm:$0xff]
        %v334 = vld [vmem:[%s253 + $0x20] sm:$0xff]
        %v335 = vld [vmem:[%s253 + $0x28] sm:$0xff]
        %v340 = vunpack.c.l.b16 %v326
        %v341 = vunpack.c.l.b16 %v327
        %v342 = vunpack.c.l.b16 %v328
        %v343 = vunpack.c.l.b16 %v329
        %v344 = vpack.c.b16 %v341, %v340
        %v345 = vpack.c.b16 %v343, %v342
        %v352 = vunpack.c.l.b16 %v330
        %v353 = vunpack.c.h.b16 %v330
        %v354 = vunpack.c.l.b16 %v331
        %v355 = vunpack.c.h.b16 %v331
        %v356 = vunpack.c.l.b16 %v332
        %v357 = vunpack.c.h.b16 %v332
        %v358 = vunpack.c.l.b16 %v333
        %v359 = vunpack.c.h.b16 %v333
        %v360 = vunpack.c.l.b16 %v334
        %v361 = vunpack.c.h.b16 %v334
        %v362 = vunpack.c.l.b16 %v335
        %v363 = vunpack.c.h.b16 %v335
        %v364 = vpack.c.b16 %v354, %v352
        %v365 = vpack.c.b16 %v355, %v353
        %v366 = vpack.c.b16 %v358, %v356
        %v367 = vpack.c.b16 %v359, %v357
        %v368 = vpack.c.b16 %v362, %v360
        %v369 = vpack.c.b16 %v363, %v361
        %vm376 = vcmask 392192
        %v378 = vsel %vm376, %v344, 0
        %v381 = vsel %vm376, %v345, 0
        %383 = vmatprep.subr.bf16.mxu0 %v365
        %384 = vmatpush1.bf16.msra.mxu0 %v364
        %385 = vmatprep.subr.bf16.mxu0 %v367
        %386 = vmatpush1.bf16.msra.mxu0 %v366
        %387 = vmatprep.subr.bf16.mxu0 %v369
        %388 = vmatpush1.bf16.msra.mxu0 %v368
        %389 = vmatprep.subr.bf16.mxu0 0
        %390 = vmatpush1.bf16.msra.mxu0 0
        %391 = vmatprep.subr.bf16.mxu0 0
        %392 = vmatpush1.bf16.msra.mxu0 0
        %393 = vmatprep.subr.bf16.mxu0 0
        %394 = vmatpush1.bf16.msra.mxu0 0
        %395 = vmatprep.subr.bf16.mxu0 0
        %396 = vmatpush1.bf16.msra.mxu0 0
        %397 = vmatprep.subr.bf16.mxu0 0
        %398 = vmatpush1.bf16.msra.mxu0 0
        %399 = vmatprep.subr.bf16.mxu0 0
        %400 = vmatpush1.bf16.msra.mxu0 0
        %401 = vmatprep.subr.bf16.mxu0 0
        %402 = vmatpush1.bf16.msra.mxu0 0
        %403 = vmatprep.subr.bf16.mxu0 0
        %404 = vmatpush1.bf16.msra.mxu0 0
        %405 = vmatprep.subr.bf16.mxu0 0
        %406 = vmatpush1.bf16.msra.mxu0 0
        %407 = vmatprep.subr.bf16.mxu0 0
        %408 = vmatpush1.bf16.msra.mxu0 0
        %409 = vmatprep.subr.bf16.mxu0 0
        %410 = vmatpush1.bf16.msra.mxu0 0
        %411 = vmatprep.subr.bf16.mxu0 0
        %412 = vmatpush1.bf16.msra.mxu0 0
        %413 = vmatprep.subr.bf16.mxu0 0
        %414 = vmatpush1.bf16.msra.mxu0 0
        %415 = vmatprep.mubr.bf16.mxu0 0
        %416 = vmatmul.mubr.bf16.gmra.mrb[0].mxu0 %v378
        %v417 = vpop.f32.mrb[0].mxu0
        %v418 = vadd.f32 0.0, %v417
        %v419 = vpop.f32.mrb[0].mxu0
        %v420 = vadd.f32 0.0, %v419
        %v421 = vpop.f32.mrb[0].mxu0
        %v422 = vadd.f32 0.0, %v421
        %v423 = vpop.f32.mrb[0].mxu0
        %v424 = vadd.f32 0.0, %v423
        %425 = vmatprep.mubr.bf16.mxu0 0
        %426 = vmatmul.mubr.bf16.gmra.mrb[0].mxu0 %v381
        %v427 = vpop.f32.mrb[0].mxu0
        %v428 = vadd.f32 0.0, %v427
        %v429 = vpop.f32.mrb[0].mxu0
        %v430 = vadd.f32 0.0, %v429
        %v431 = vpop.f32.mrb[0].mxu0
        %v432 = vadd.f32 0.0, %v431
        %v433 = vpop.f32.mrb[0].mxu0
        %v434 = vadd.f32 0.0, %v433
        %435 = vdwg.mxu0
        %v436 = vadd.f32 %v318, %v418
        %v437 = vadd.f32 %v319, %v420
        %v438 = vadd.f32 %v320, %v422
        %v439 = vadd.f32 %v321, %v424
        %v440 = vadd.f32 %v322, %v428
        %v441 = vadd.f32 %v323, %v430
        %v442 = vadd.f32 %v324, %v432
        %v443 = vadd.f32 %v325, %v434
        %444 = vst [vmem:[#allocation2] sm:$0xff] %v436
        %445 = vst [vmem:[#allocation2 + $0x8] sm:$0xff] %v437
        %446 = vst [vmem:[#allocation2 + $0x10] sm:$0xff] %v438
        %447 = vst [vmem:[#allocation2 + $0x18] sm:$0xff] %v439
        %448 = vst [vmem:[#allocation2 + $0x20] sm:$0xff] %v440
        %449 = vst [vmem:[#allocation2 + $0x28] sm:$0xff] %v441
        %450 = vst [vmem:[#allocation2 + $0x30] sm:$0xff] %v442
        %451 = vst [vmem:[#allocation2 + $0x38] sm:$0xff] %v443
        // Predicated region
        $region75: #{bn_conv2d_cm.1} parent=65 // pred_check
          %p452 = pneg %p306
        $region76: #{bn_conv2d_cm.1} parent=65 // pred_check_branch
          %454 = sbr.rel (%p452) target = $region78
        $region77: #{bn_conv2d_cm.1} parent=65 // pred_region
          %v455 = vld [vmem:[#allocation2] sm:$0xff]
          %v456 = vld [vmem:[#allocation2 + $0x8] sm:$0xff]
          %v457 = vld [vmem:[#allocation2 + $0x10] sm:$0xff]
          %v458 = vld [vmem:[#allocation2 + $0x18] sm:$0xff]
          %v459 = vld [vmem:[#allocation2 + $0x20] sm:$0xff]
          %v460 = vld [vmem:[#allocation2 + $0x28] sm:$0xff]
          %v461 = vld [vmem:[#allocation2 + $0x30] sm:$0xff]
          %v462 = vld [vmem:[#allocation2 + $0x38] sm:$0xff]
          %v463 = vld [vmem:[%s301] sm:$0xff]
          %v464 = vld [vmem:[%s301 + $0x8] sm:$0xff]
          %v465 = vld [vmem:[%s301 + $0x10] sm:$0xff]
          %v466 = vld [vmem:[%s301 + $0x18] sm:$0xff]
          %468 = vset.pattern.permute.xlu0 0
          %469 = vperm.xlu0 %468, %v463
          %v470 = vpop.permute.xlu0 %469
          %473 = vset.pattern.permute.xlu0 0
          %474 = vperm.xlu0 %473, %v464
          %v475 = vpop.permute.xlu0 %474
          %478 = vset.pattern.permute.xlu0 0
          %479 = vperm.xlu0 %478, %v465
          %v480 = vpop.permute.xlu0 %479
          %483 = vset.pattern.permute.xlu0 0
          %484 = vperm.xlu0 %483, %v466
          %v485 = vpop.permute.xlu0 %484
          %v487 = vadd.f32 %v455, %v470
          %v488 = vadd.f32 %v456, %v470
          %v489 = vadd.f32 %v457, %v475
          %v490 = vadd.f32 %v458, %v475
          %v491 = vadd.f32 %v459, %v480
          %v492 = vadd.f32 %v460, %v480
          %v493 = vadd.f32 %v461, %v485
          %v494 = vadd.f32 %v462, %v485
          %v495 = vmax.f32 %v487, 0.0
          %v496 = vmax.f32 %v488, 0.0
          %v497 = vmax.f32 %v489, 0.0
          %v498 = vmax.f32 %v490, 0.0
          %v499 = vmax.f32 %v491, 0.0
          %v500 = vmax.f32 %v492, 0.0
          %v501 = vmax.f32 %v493, 0.0
          %v502 = vmax.f32 %v494, 0.0
          %503 = vst [vmem:[%s285] sm:$0xff] %v495
          %504 = vst [vmem:[%s285 + $0x8] sm:$0xff] %v496
          %505 = vst [vmem:[%s285 + $0x10] sm:$0xff] %v497
          %506 = vst [vmem:[%s285 + $0x18] sm:$0xff] %v498
          %507 = vst [vmem:[%s285 + $0x20] sm:$0xff] %v499
          %508 = vst [vmem:[%s285 + $0x28] sm:$0xff] %v500
          %509 = vst [vmem:[%s285 + $0x30] sm:$0xff] %v501
          %510 = vst [vmem:[%s285 + $0x38] sm:$0xff] %v502
        $region78: #{bn_conv2d_cm.1} parent=65 // pred_fallthru
          _
        %s511 = sand.u32 %s125, 1
        %s512 = sand.u32 %s125, 1
        %s513 = smul.addr %s512, 64
        %s514 = scalar_lea.vmem [#allocation4], %s513
        // Predicated region
        $region79: #{bn_conv2d_cm.1} parent=65 // pred_check
          %p515 = pneg %p135
        $region80: #{bn_conv2d_cm.1} parent=65 // pred_check_branch
          %517 = sbr.rel (%p515) target = $region82
        $region81: #{bn_conv2d_cm.1} parent=65 // pred_region
          %s518 = smul.u32 4, %s19
          %s519 = smul.u32 2, %s20
          %s520 = smul.addr %s518, 4
          %s521 = sadd.s32 %s519, %s520
          %s522 = smul.addr %s521, 8
          %s523 = scalar_lea.vmem %s3, %s522
          // Predicated region
          $region83: #{bn_conv2d_cm.1} parent=81 // pred_check
            _
          $region84: #{bn_conv2d_cm.1} parent=81 // pred_check_branch
            %525 = sbr.rel (0) target = $region86
          $region85: #{bn_conv2d_cm.1} parent=81 // pred_region
            // Predicated region
            $region87: #{bn_conv2d_cm.1} parent=85 // pred_check
              _
            $region88: #{bn_conv2d_cm.1} parent=85 // pred_check_branch
              %527 = sbr.rel (0) target = $region90
            $region89: #{bn_conv2d_cm.1} parent=85 // pred_region
              loop: start=0, step=1, limit=1
              $region91: #{bn_conv2d_cm.1} parent=89 // loop_pre_header
                _
              $region92: #{bn_conv2d_cm.1} parent=89 // loop_header
                %s529 = sphi 0, %s533
                %p530 = scmp.ge.s32.totalorder %s529, 1
                %s534 = sphi %s514, %s514
                %s535 = sphi %s523, %s523
              $region93: #{bn_conv2d_cm.1} parent=89 // loop_header_branch
                %532 = sbr.rel (%p530) target = $region97
              $region94: #{bn_conv2d_cm.1} parent=89 // loop_body
                %v536 = vld [vmem:[%s534] sm:$0xff]
                %537 = vst [vmem:[%s535] sm:$0xff] %v536
                %v538 = vld [vmem:[%s534 + $0x8] sm:$0xff]
                %539 = vst [vmem:[%s535 + $0x8] sm:$0xff] %v538
                %v540 = vld [vmem:[%s534 + $0x10] sm:$0xff]
                %541 = vst [vmem:[%s535 + $0x20] sm:$0xff] %v540
                %v542 = vld [vmem:[%s534 + $0x18] sm:$0xff]
                %543 = vst [vmem:[%s535 + $0x28] sm:$0xff] %v542
                %v544 = vld [vmem:[%s534 + $0x20] sm:$0xff]
                %545 = vst [vmem:[%s535 + $0x40] sm:$0xff] %v544
                %v546 = vld [vmem:[%s534 + $0x28] sm:$0xff]
                %547 = vst [vmem:[%s535 + $0x48] sm:$0xff] %v546
                %v548 = vld [vmem:[%s534 + $0x30] sm:$0xff]
                %549 = vst [vmem:[%s535 + $0x60] sm:$0xff] %v548
                %v550 = vld [vmem:[%s534 + $0x38] sm:$0xff]
                %551 = vst [vmem:[%s535 + $0x68] sm:$0xff] %v550
              $region95: #{bn_conv2d_cm.1} parent=89 // loop_footer
                %s533 = sadd.s32 1, %s529
              $region96: #{bn_conv2d_cm.1} parent=89 // loop_footer_branch
                %528 = sbr.rel target = $region92
              $region97: #{bn_conv2d_cm.1} parent=89 // loop_exit
                _
            $region90: #{bn_conv2d_cm.1} parent=85 // pred_fallthru
              _
            // Predicated region
            $region98: #{bn_conv2d_cm.1} parent=85 // pred_check
              _
            $region99: #{bn_conv2d_cm.1} parent=85 // pred_check_branch
              %553 = sbr.rel target = $region101
            $region100: #{bn_conv2d_cm.1} parent=85 // pred_region
              _
            $region101: #{bn_conv2d_cm.1} parent=85 // pred_fallthru
              _
          $region86: #{bn_conv2d_cm.1} parent=81 // pred_fallthru
            _
          %554 = vnop
        $region82: #{bn_conv2d_cm.1} parent=65 // pred_fallthru
          _
      $region66: #{bn_conv2d_cm.1} parent=5 // pred_fallthru
        _
      %p555 = scmp.le.s32.totalorder 2, %s9
      // Predicated region
      $region102: #{bn_conv2d_cm.1} parent=5 // pred_check
        %p556 = pneg %p555
      $region103: #{bn_conv2d_cm.1} parent=5 // pred_check_branch
        %558 = sbr.rel (%p556) target = $region105
      $region104: #{bn_conv2d_cm.1} parent=5 // pred_region
        %s559 = ssub.s32 %s9, 2
        // Predicated region
        $region106: #{bn_conv2d_cm.1} parent=104 // pred_check
          %p560 = pneg %p141
        $region107: #{bn_conv2d_cm.1} parent=104 // pred_check_branch
          %562 = sbr.rel (%p560) target = $region109
        $region108: #{bn_conv2d_cm.1} parent=104 // pred_region
          %s563 = sand.u32 %s126, 1
          %s564 = sand.u32 %s126, 1
          %s565 = smul.addr %s564, 64
          %s566 = scalar_lea.vmem [#allocation4], %s565
        $region109: #{bn_conv2d_cm.1} parent=104 // pred_fallthru
          _
      $region105: #{bn_conv2d_cm.1} parent=5 // pred_fallthru
        _
    $region6: #{bn_conv2d_cm.1} parent=1 // loop_footer
      %s13 = sadd.s32 1, %s9
    $region7: #{bn_conv2d_cm.1} parent=1 // loop_footer_branch
      %8 = sbr.rel target = $region3
    $region8: #{bn_conv2d_cm.1} parent=1 // loop_exit
      _

</llo_original>
